<compile_context>
chip_gen: v7x
topology: tpu7x:2x2x1
jax: 0.10.0
libtpu: 0.0.40
codegen_flags: <defaults>
</compile_context>

<pallas_src>
import jax
import jax.numpy as jnp
from jax.experimental import pallas as pl
from jax.experimental.pallas import tpu as pltpu

H1 = 512          # hidden 1
H2 = 128          # hidden 2


def _round_up(n, m):
    return ((n + m - 1) // m) * m


def _fnn_kernel(x_ref, w1_ref, b1_ref, w2_ref, b2_ref, w3_ref, b3_ref, o_ref):
    # x block: (TB, K) f32 -> cast to bf16 in-kernel (no wrapper pre-pass).
    x = x_ref[...].astype(jnp.bfloat16)

    # Layer 1: Linear(K, 512) + ReLU  (bf16 MXU operands, f32 accumulation,
    # elementwise kept in f32 -- v5e VPU has no bf16).
    h1 = jnp.dot(x, w1_ref[...], preferred_element_type=jnp.float32)
    h1 = jnp.maximum(h1 + b1_ref[...], 0.0)
    # Dropout(0.3): identity in inference mode.

    # Layer 2: Linear(512, 128) + ReLU
    h2 = jnp.dot(h1.astype(jnp.bfloat16), w2_ref[...],
                 preferred_element_type=jnp.float32)
    h2 = jnp.maximum(h2 + b2_ref[...], 0.0)
    # Dropout(0.3): identity in inference mode.

    # Layer 3: Linear(128, num_classes).  Narrow (num_classes-wide) store, but
    # the writeback is only B*num_classes*4 bytes -- far cheaper than a padded
    # 128-lane slab plus a post-kernel slice pass.
    out = jnp.dot(h2.astype(jnp.bfloat16), w3_ref[...],
                  preferred_element_type=jnp.float32)
    o_ref[...] = (out + b3_ref[...]).astype(o_ref.dtype)


def prepare_params(params):
    """One-time layout/dtype prep (call once, NOT per forward):
    weights -> bf16 (in, out); biases -> f32 (1, out)."""
    return {
        "w1": params["w1"].astype(jnp.bfloat16),
        "b1": params["b1"].reshape(1, -1).astype(jnp.float32),
        "w2": params["w2"].astype(jnp.bfloat16),
        "b2": params["b2"].reshape(1, -1).astype(jnp.float32),
        "w3": params["w3"].astype(jnp.bfloat16),
        "b3": params["b3"].reshape(1, -1).astype(jnp.float32),
    }


def fnn_forward(x, prepared, *, batch_tile=512):
    """x: [B, input_dim] float32.  prepared: output of prepare_params()."""
    B, K = x.shape
    C = prepared["w3"].shape[1]

    # Batch tile: multiple of 16 (bf16 sublane packing for the intermediates),
    # aims for >= 2 grid steps so the "parallel" axis can shard across v7x's
    # two TensorCores, capped at batch_tile.  For tiny batches fall back to a
    # single full-batch block (block dim == array dim is always legal).
    TB = min(batch_tile, _round_up(max((B + 1) // 2, 1), 16))
    if TB >= B:
        TB = B
    grid = (pl.cdiv(B, TB),)

    # VMEM budget: single-buffered resident weights + double-buffered x/out
    # streams + f32/bf16 intermediates + headroom, clamped below v7x's 64 MiB.
    resident_bytes = (K * H1 + H1 * H2 + H2 * C) * 2 + (H1 + H2 + C) * 4
    stream_bytes = 2 * TB * K * 4 + 2 * TB * C * 4
    scratch_bytes = TB * (H1 + H2) * 6
    vmem_limit = int(min(max(resident_bytes + stream_bytes + scratch_bytes
                             + (8 << 20), 16 << 20), 48 << 20))

    # Cost hint for XLA scheduling around the custom call.
    flops = 2 * B * (K * H1 + H1 * H2 + H2 * C)
    bytes_accessed = (B * K * 4 + (K * H1 + H1 * H2 + H2 * C) * 2
                      + (H1 + H2 + C) * 4 + B * C * 4)

    # Resident operands: constant index_map -> single buffer is enough.
    resident = dict(pipeline_mode=pl.Buffered(1))

    out = pl.pallas_call(
        _fnn_kernel,
        out_shape=jax.ShapeDtypeStruct((B, C), jnp.float32),
        grid=grid,
        in_specs=[
            pl.BlockSpec((TB, K), lambda i: (i, 0)),              # x: tiled over batch
            pl.BlockSpec((K, H1), lambda i: (0, 0), **resident),  # w1 resident
            pl.BlockSpec((1, H1), lambda i: (0, 0), **resident),  # b1 resident
            pl.BlockSpec((H1, H2), lambda i: (0, 0), **resident), # w2 resident
            pl.BlockSpec((1, H2), lambda i: (0, 0), **resident),  # b2 resident
            pl.BlockSpec((H2, C), lambda i: (0, 0), **resident),  # w3 resident
            pl.BlockSpec((1, C), lambda i: (0, 0), **resident),   # b3 resident
        ],
        out_specs=pl.BlockSpec((TB, C), lambda i: (i, 0)),
        compiler_params=pltpu.CompilerParams(
            dimension_semantics=("parallel",),
            vmem_limit_bytes=vmem_limit),
        cost_estimate=pl.CostEstimate(
            flops=flops, transcendentals=0, bytes_accessed=bytes_accessed),
    )(x.astype(jnp.float32), prepared["w1"], prepared["b1"],
      prepared["w2"], prepared["b2"], prepared["w3"], prepared["b3"])
    return out


def init_params(key, input_dim, num_classes=4):
    """Deterministic init mimicking nn.Linear's uniform(-1/sqrt(fan_in), ...).
    Weights stored as (in_features, out_features); biases as (1, out)."""
    dims = [(input_dim, H1), (H1, H2), (H2, num_classes)]
    params = {}
    for i, (fan_in, fan_out) in enumerate(dims, start=1):
        key, kw, kb = jax.random.split(key, 3)
        bound = 1.0 / (fan_in ** 0.5)
        params[f"w{i}"] = jax.random.uniform(
            kw, (fan_in, fan_out), jnp.float32, minval=-bound, maxval=bound)
        params[f"b{i}"] = jax.random.uniform(
            kb, (1, fan_out), jnp.float32, minval=-bound, maxval=bound)
    return params


def fnn_reference(x, params):
    h = jnp.maximum(x @ params["w1"] + params["b1"], 0.0)
    h = jnp.maximum(h @ params["w2"] + params["b2"], 0.0)
    return h @ params["w3"] + params["b3"]


if __name__ == "__main__":
    key = jax.random.PRNGKey(0)

    # Case 1: toy shape (single grid step, tiny batch path).
    B, input_dim, num_classes = 8, 32, 4
    key, kx, kp = jax.random.split(key, 3)
    x = jax.random.normal(kx, (B, input_dim), jnp.float32)
    params = init_params(kp, input_dim, num_classes)
    prepared = prepare_params(params)          # one-time prep, outside forward

    out = fnn_forward(x, prepared)
    jax.block_until_ready(out)
    ref = fnn_reference(x, params)
    assert out.shape == (B, num_classes)
    # bf16 matmul operands (f32 accumulation) -> looser tolerance vs f32 ref.
    assert jnp.allclose(out, ref, atol=5e-2, rtol=5e-2), float(
        jnp.max(jnp.abs(out - ref)))

    # Case 2: ragged batch / K -> multi-step batch grid with a partial edge block.
    B2, input_dim2 = 300, 200
    key, kx2, kp2 = jax.random.split(key, 3)
    x2 = jax.random.normal(kx2, (B2, input_dim2), jnp.float32)
    params2 = init_params(kp2, input_dim2, num_classes)
    prepared2 = prepare_params(params2)

    out2 = fnn_forward(x2, prepared2)
    jax.block_until_ready(out2)
    ref2 = fnn_reference(x2, params2)
    assert out2.shape == (B2, num_classes)
    assert jnp.allclose(out2, ref2, atol=5e-2, rtol=5e-2), float(
        jnp.max(jnp.abs(out2 - ref2)))

    print("KERNEL_OK")
</pallas_src>

<mosaic_0001>
module attributes {stable_mosaic.version = 11 : i64} {
  func.func @_fnn_kernel(%arg0: i32, %arg1: memref<8x32xf32, #tpu.memory_space<vmem>>, %arg2: memref<32x512xbf16, #tpu.memory_space<vmem>>, %arg3: memref<1x512xf32, #tpu.memory_space<vmem>>, %arg4: memref<512x128xbf16, #tpu.memory_space<vmem>>, %arg5: memref<1x128xf32, #tpu.memory_space<vmem>>, %arg6: memref<128x4xbf16, #tpu.memory_space<vmem>>, %arg7: memref<1x4xf32, #tpu.memory_space<vmem>>, %arg8: memref<8x4xf32, #tpu.memory_space<vmem>>) attributes {dimension_semantics = [#tpu.dimension_semantics<parallel>], iteration_bounds = array<i64: 1>, scalar_prefetch = 0 : i64, scratch_operands = 0 : i64, tpu.core_type = #tpu.core_type<tc>, window_params = [{transform_indices = @transform_0, window_bounds = array<i64: 8, 32>}, {pipeline_mode = #tpu.pipeline_mode<synchronous>, transform_indices = @transform_1, window_bounds = array<i64: 32, 512>}, {pipeline_mode = #tpu.pipeline_mode<synchronous>, transform_indices = @transform_2, window_bounds = array<i64: 1, 512>}, {pipeline_mode = #tpu.pipeline_mode<synchronous>, transform_indices = @transform_3, window_bounds = array<i64: 512, 128>}, {pipeline_mode = #tpu.pipeline_mode<synchronous>, transform_indices = @transform_4, window_bounds = array<i64: 1, 128>}, {pipeline_mode = #tpu.pipeline_mode<synchronous>, transform_indices = @transform_5, window_bounds = array<i64: 128, 4>}, {pipeline_mode = #tpu.pipeline_mode<synchronous>, transform_indices = @transform_6, window_bounds = array<i64: 1, 4>}, {transform_indices = @transform_7, window_bounds = array<i64: 8, 4>}]} {
    %c0 = arith.constant 0 : index
    %c0_0 = arith.constant 0 : index
    %0 = vector.load %arg1[%c0, %c0_0] : memref<8x32xf32, #tpu.memory_space<vmem>>, vector<8x32xf32>
    %1 = arith.truncf %0 : vector<8x32xf32> to vector<8x32xbf16>
    %c0_1 = arith.constant 0 : index
    %c0_2 = arith.constant 0 : index
    %2 = vector.load %arg2[%c0_1, %c0_2] : memref<32x512xbf16, #tpu.memory_space<vmem>>, vector<32x512xbf16>
    %cst = arith.constant dense<0.000000e+00> : vector<8x512xf32>
    %3 = tpu.matmul %1, %2, %cst {dimension_numbers = #tpu.dot_dimension_numbers<[1], [0], [0], [1], [0, 0, 1, 1], [], []>} : vector<8x32xbf16>, vector<32x512xbf16>, vector<8x512xf32> -> vector<8x512xf32>
    %c0_3 = arith.constant 0 : index
    %c0_4 = arith.constant 0 : index
    %4 = vector.load %arg3[%c0_3, %c0_4] : memref<1x512xf32, #tpu.memory_space<vmem>>, vector<1x512xf32>
    %5 = vector.broadcast %4 : vector<1x512xf32> to vector<8x512xf32>
    %6 = arith.addf %3, %5 : vector<8x512xf32>
    %cst_5 = arith.constant 0.000000e+00 : f32
    %7 = vector.broadcast %cst_5 : f32 to vector<8x512xf32>
    %8 = arith.maximumf %6, %7 : vector<8x512xf32>
    %9 = arith.truncf %8 : vector<8x512xf32> to vector<8x512xbf16>
    %c0_6 = arith.constant 0 : index
    %c0_7 = arith.constant 0 : index
    %10 = vector.load %arg4[%c0_6, %c0_7] : memref<512x128xbf16, #tpu.memory_space<vmem>>, vector<512x128xbf16>
    %cst_8 = arith.constant dense<0.000000e+00> : vector<8x128xf32>
    %11 = tpu.matmul %9, %10, %cst_8 {dimension_numbers = #tpu.dot_dimension_numbers<[1], [0], [0], [1], [0, 0, 1, 1], [], []>} : vector<8x512xbf16>, vector<512x128xbf16>, vector<8x128xf32> -> vector<8x128xf32>
    %c0_9 = arith.constant 0 : index
    %c0_10 = arith.constant 0 : index
    %12 = vector.load %arg5[%c0_9, %c0_10] : memref<1x128xf32, #tpu.memory_space<vmem>>, vector<1x128xf32>
    %13 = vector.broadcast %12 : vector<1x128xf32> to vector<8x128xf32>
    %14 = arith.addf %11, %13 : vector<8x128xf32>
    %cst_11 = arith.constant 0.000000e+00 : f32
    %15 = vector.broadcast %cst_11 : f32 to vector<8x128xf32>
    %16 = arith.maximumf %14, %15 : vector<8x128xf32>
    %17 = arith.truncf %16 : vector<8x128xf32> to vector<8x128xbf16>
    %c0_12 = arith.constant 0 : index
    %c0_13 = arith.constant 0 : index
    %18 = vector.load %arg6[%c0_12, %c0_13] : memref<128x4xbf16, #tpu.memory_space<vmem>>, vector<128x4xbf16>
    %cst_14 = arith.constant dense<0.000000e+00> : vector<8x4xf32>
    %19 = tpu.matmul %17, %18, %cst_14 {dimension_numbers = #tpu.dot_dimension_numbers<[1], [0], [0], [1], [0, 0, 1, 1], [], []>} : vector<8x128xbf16>, vector<128x4xbf16>, vector<8x4xf32> -> vector<8x4xf32>
    %c0_15 = arith.constant 0 : index
    %c0_16 = arith.constant 0 : index
    %20 = vector.load %arg7[%c0_15, %c0_16] : memref<1x4xf32, #tpu.memory_space<vmem>>, vector<1x4xf32>
    %21 = vector.broadcast %20 : vector<1x4xf32> to vector<8x4xf32>
    %22 = arith.addf %19, %21 : vector<8x4xf32>
    %c0_17 = arith.constant 0 : index
    %c0_18 = arith.constant 0 : index
    %23 = vector.load %arg8[%c0_17, %c0_18] : memref<8x4xf32, #tpu.memory_space<vmem>>, vector<8x4xf32>
    tpu.vector_store %arg8[%c0_17, %c0_18], %22 {strides = array<i32>} : memref<8x4xf32, #tpu.memory_space<vmem>>, vector<8x4xf32>,
    return
  }
  func.func @transform_0(%arg0: i32) -> (i32, i32) {
    %c0_i32 = arith.constant 0 : i32
    %c0_i32_0 = arith.constant 0 : i32
    return %arg0, %c0_i32 : i32, i32
  }
  func.func @transform_1(%arg0: i32) -> (i32, i32) {
    %c0_i32 = arith.constant 0 : i32
    %c0_i32_0 = arith.constant 0 : i32
    %c0_i32_1 = arith.constant 0 : i32
    return %c0_i32, %c0_i32_0 : i32, i32
  }
  func.func @transform_2(%arg0: i32) -> (i32, i32) {
    %c0_i32 = arith.constant 0 : i32
    %c0_i32_0 = arith.constant 0 : i32
    %c0_i32_1 = arith.constant 0 : i32
    return %c0_i32, %c0_i32_0 : i32, i32
  }
  func.func @transform_3(%arg0: i32) -> (i32, i32) {
    %c0_i32 = arith.constant 0 : i32
    %c0_i32_0 = arith.constant 0 : i32
    %c0_i32_1 = arith.constant 0 : i32
    return %c0_i32, %c0_i32_0 : i32, i32
  }
  func.func @transform_4(%arg0: i32) -> (i32, i32) {
    %c0_i32 = arith.constant 0 : i32
    %c0_i32_0 = arith.constant 0 : i32
    %c0_i32_1 = arith.constant 0 : i32
    return %c0_i32, %c0_i32_0 : i32, i32
  }
  func.func @transform_5(%arg0: i32) -> (i32, i32) {
    %c0_i32 = arith.constant 0 : i32
    %c0_i32_0 = arith.constant 0 : i32
    %c0_i32_1 = arith.constant 0 : i32
    return %c0_i32, %c0_i32_0 : i32, i32
  }
  func.func @transform_6(%arg0: i32) -> (i32, i32) {
    %c0_i32 = arith.constant 0 : i32
    %c0_i32_0 = arith.constant 0 : i32
    %c0_i32_1 = arith.constant 0 : i32
    return %c0_i32, %c0_i32_0 : i32, i32
  }
  func.func @transform_7(%arg0: i32) -> (i32, i32) {
    %c0_i32 = arith.constant 0 : i32
    %c0_i32_0 = arith.constant 0 : i32
    return %arg0, %c0_i32 : i32, i32
  }
}

</mosaic_0001>

<llo_original>
// kernel: tpu_custom_call.1
$region0: #{tpu_custom_call.1}
  #allocation0 [shape = 'u32[]', space=smem, size = 0x4, offset = 0x4, fixed_abs, tag = 'smem constant byte address 0x4 - core index']
  #allocation1 [shape = 'u32[144,128]{1,0:T(1,128)}', space=vmem, size = 0x12000, scoped, tag = 'internal scratch']
  %s0 = inlined_call_operand.hbm [shape: f32[8,32], index: 0, kind: input, shape index: {}]
  %s1 = inlined_call_operand.vmem [shape: bf16[32,512], index: 1, kind: input, shape index: {}]
  %s2 = inlined_call_operand.vmem [shape: f32[1,512], index: 2, kind: input, shape index: {}]
  %s3 = inlined_call_operand.hbm [shape: bf16[512,128], index: 3, kind: input, shape index: {}]
  %s4 = inlined_call_operand.vmem [shape: f32[1,128], index: 4, kind: input, shape index: {}]
  %s5 = inlined_call_operand.vmem [shape: bf16[128,4], index: 5, kind: input, shape index: {}]
  %s6 = inlined_call_operand.vmem [shape: f32[1,4], index: 6, kind: input, shape index: {}]
  %s7 = inlined_call_operand.vmem [shape: f32[8,4], index: 7, kind: output, shape index: {}]
  %s8 = sld [smem:[#allocation0]]
  $region46: #{tpu_custom_call.1} parent=0
    _
  %s10 = ssub.s32 1, %s8
  %s11 = scalar_select 0, %s10, %s8
  $region1: #{tpu_custom_call.1} parent=0
    #allocation2 [shape = 'u8[4096]{0}', space=vmem, size = 0x1000, scoped, tag = 'input window, operand 0, single buffered']
    #allocation3 [shape = 's32[1]{0}', space=sflag, size = 0x4, scoped, tag = 'scoped memory for tpu_custom_call.1']
    #allocation4 [shape = 'u8[131072]{0}', space=vmem, size = 0x20000, scoped, tag = 'input window, operand 3, single buffered']
    #allocation5 [shape = 's32[1]{0}', space=sflag, size = 0x4, scoped, tag = 'scoped memory for tpu_custom_call.1']
    %12 = vsyncpa [#allocation3], 0
    %13 = vsyncpa [#allocation5], 0
    // Predicated region
    $region2: #{tpu_custom_call.1} parent=1 // pred_check
      _
    $region3: #{tpu_custom_call.1} parent=1 // pred_check_branch
      %15 = sbr.rel (0) target = $region5
    $region4: #{tpu_custom_call.1} parent=1 // pred_region
      %s17 = ssub.s32 128, 128
      %18 = vsyncadd [#allocation3], %s17
      %s20 = sshll.u32 [#allocation2], 4
      %s21 = int_to_ptr.vmem [resolvable:$true] %s20
      %23 = dma.hbm_to_vmem [thread:$0]  %s0, 128, %s21, [#allocation3]
    $region5: #{tpu_custom_call.1} parent=1 // pred_fallthru
      _
    // Predicated region
    $region6: #{tpu_custom_call.1} parent=1 // pred_check
      _
    $region7: #{tpu_custom_call.1} parent=1 // pred_check_branch
      %25 = sbr.rel (0) target = $region9
    $region8: #{tpu_custom_call.1} parent=1 // pred_region
      _
    $region9: #{tpu_custom_call.1} parent=1 // pred_fallthru
      _
    // Predicated region
    $region10: #{tpu_custom_call.1} parent=1 // pred_check
      _
    $region11: #{tpu_custom_call.1} parent=1 // pred_check_branch
      %27 = sbr.rel (0) target = $region13
    $region12: #{tpu_custom_call.1} parent=1 // pred_region
      _
    $region13: #{tpu_custom_call.1} parent=1 // pred_fallthru
      _
    // Predicated region
    $region14: #{tpu_custom_call.1} parent=1 // pred_check
      _
    $region15: #{tpu_custom_call.1} parent=1 // pred_check_branch
      %29 = sbr.rel (0) target = $region17
    $region16: #{tpu_custom_call.1} parent=1 // pred_region
      %s31 = ssub.s32 4096, 4096
      %32 = vsyncadd [#allocation5], %s31
      %s33 = sshll.u32 [#allocation4], 4
      %s34 = int_to_ptr.vmem [resolvable:$true] %s33
      %39 = dma.hbm_to_vmem [thread:$0]  %s3, 4096, %s34, [#allocation5], 64, 64, 4
    $region17: #{tpu_custom_call.1} parent=1 // pred_fallthru
      _
    // Predicated region
    $region18: #{tpu_custom_call.1} parent=1 // pred_check
      _
    $region19: #{tpu_custom_call.1} parent=1 // pred_check_branch
      %41 = sbr.rel (0) target = $region21
    $region20: #{tpu_custom_call.1} parent=1 // pred_region
      _
    $region21: #{tpu_custom_call.1} parent=1 // pred_fallthru
      _
    // Predicated region
    $region22: #{tpu_custom_call.1} parent=1 // pred_check
      _
    $region23: #{tpu_custom_call.1} parent=1 // pred_check_branch
      %43 = sbr.rel (0) target = $region25
    $region24: #{tpu_custom_call.1} parent=1 // pred_region
      _
    $region25: #{tpu_custom_call.1} parent=1 // pred_fallthru
      _
    // Predicated region
    $region26: #{tpu_custom_call.1} parent=1 // pred_check
      _
    $region27: #{tpu_custom_call.1} parent=1 // pred_check_branch
      %45 = sbr.rel (0) target = $region29
    $region28: #{tpu_custom_call.1} parent=1 // pred_region
      _
    $region29: #{tpu_custom_call.1} parent=1 // pred_fallthru
      _
    // Predicated region
    $region30: #{tpu_custom_call.1} parent=1 // pred_check
      _
    $region31: #{tpu_custom_call.1} parent=1 // pred_check_branch
      %47 = sbr.rel (0) target = $region33
    $region32: #{tpu_custom_call.1} parent=1 // pred_region
      %48 = dma.done [#allocation3], 128
    $region33: #{tpu_custom_call.1} parent=1 // pred_fallthru
      _
    // Predicated region
    $region34: #{tpu_custom_call.1} parent=1 // pred_check
      _
    $region35: #{tpu_custom_call.1} parent=1 // pred_check_branch
      %50 = sbr.rel (0) target = $region37
    $region36: #{tpu_custom_call.1} parent=1 // pred_region
      %51 = dma.done [#allocation5], 4096
    $region37: #{tpu_custom_call.1} parent=1 // pred_fallthru
      _
    %v53 = vld [vmem:[#allocation2] sm:$0xff]
    %v54 = vpack.c.bf16 %v53, %v53
    %v55 = vld [vmem:[%s1] sm:$0xff]
    %v56 = vld [vmem:[%s1 + $0x8] sm:$0xff]
    %v57 = vld [vmem:[%s1 + $0x10] sm:$0xff]
    %v58 = vld [vmem:[%s1 + $0x18] sm:$0xff]
    %v59 = vld [vmem:[%s1 + $0x20] sm:$0xff]
    %v60 = vld [vmem:[%s1 + $0x28] sm:$0xff]
    %v61 = vld [vmem:[%s1 + $0x30] sm:$0xff]
    %v62 = vld [vmem:[%s1 + $0x38] sm:$0xff]
    %v63 = vld [vmem:[%s2] sm:$0xf]
    %v65 = vlaneseq
    %v66 = vshrl.u32 %v65, 7
    %v67 = vsub.s32 0, %v66
    %v68 = vrot.slane %v63, %v67
    %v69 = vlaneseq
    %v70 = vshrl.u32 %v69, 7
    %v71 = vsub.s32 1, %v70
    %v72 = vrot.slane %v63, %v71
    %v73 = vlaneseq
    %v74 = vshrl.u32 %v73, 7
    %v75 = vsub.s32 2, %v74
    %v76 = vrot.slane %v63, %v75
    %v77 = vlaneseq
    %v78 = vshrl.u32 %v77, 7
    %v79 = vsub.s32 3, %v78
    %v80 = vrot.slane %v63, %v79
    %v93 = vunpack.c.l.b16 %v55
    %v94 = vunpack.c.h.b16 %v55
    %v95 = vunpack.c.l.b16 %v56
    %v96 = vunpack.c.h.b16 %v56
    %v97 = vunpack.c.l.b16 %v57
    %v98 = vunpack.c.h.b16 %v57
    %v99 = vunpack.c.l.b16 %v58
    %v100 = vunpack.c.h.b16 %v58
    %v101 = vunpack.c.l.b16 %v59
    %v102 = vunpack.c.h.b16 %v59
    %v103 = vunpack.c.l.b16 %v60
    %v104 = vunpack.c.h.b16 %v60
    %v105 = vunpack.c.l.b16 %v61
    %v106 = vunpack.c.h.b16 %v61
    %v107 = vunpack.c.l.b16 %v62
    %v108 = vunpack.c.h.b16 %v62
    %v109 = vpack.c.b16 %v97, %v93
    %v110 = vpack.c.b16 %v98, %v94
    %v111 = vpack.c.b16 %v99, %v95
    %v112 = vpack.c.b16 %v100, %v96
    %v113 = vpack.c.b16 %v105, %v101
    %v114 = vpack.c.b16 %v106, %v102
    %v115 = vpack.c.b16 %v107, %v103
    %v116 = vpack.c.b16 %v108, %v104
    %vm125 = vcmask 261120
    %v127 = vsel %vm125, %v54, 0
    %129 = vmatprep.subr.bf16.mxu0 %v110
    %130 = vmatpush1.bf16.msra.mxu0 %v109
    %131 = vmatprep.subr.bf16.mxu0 %v114
    %132 = vmatpush1.bf16.msra.mxu0 %v113
    %133 = vmatprep.subr.bf16.mxu0 0
    %134 = vmatpush1.bf16.msra.mxu0 0
    %135 = vmatprep.subr.bf16.mxu0 0
    %136 = vmatpush1.bf16.msra.mxu0 0
    %137 = vmatprep.subr.bf16.mxu0 0
    %138 = vmatpush1.bf16.msra.mxu0 0
    %139 = vmatprep.subr.bf16.mxu0 0
    %140 = vmatpush1.bf16.msra.mxu0 0
    %141 = vmatprep.subr.bf16.mxu0 0
    %142 = vmatpush1.bf16.msra.mxu0 0
    %143 = vmatprep.subr.bf16.mxu0 0
    %144 = vmatpush1.bf16.msra.mxu0 0
    %145 = vmatprep.subr.bf16.mxu0 0
    %146 = vmatpush1.bf16.msra.mxu0 0
    %147 = vmatprep.subr.bf16.mxu0 0
    %148 = vmatpush1.bf16.msra.mxu0 0
    %149 = vmatprep.subr.bf16.mxu0 0
    %150 = vmatpush1.bf16.msra.mxu0 0
    %151 = vmatprep.subr.bf16.mxu0 0
    %152 = vmatpush1.bf16.msra.mxu0 0
    %153 = vmatprep.subr.bf16.mxu0 0
    %154 = vmatpush1.bf16.msra.mxu0 0
    %155 = vmatprep.subr.bf16.mxu0 0
    %156 = vmatpush1.bf16.msra.mxu0 0
    %157 = vmatprep.subr.bf16.mxu0 0
    %158 = vmatpush1.bf16.msra.mxu0 0
    %159 = vmatprep.subr.bf16.mxu0 0
    %160 = vmatpush1.bf16.msra.mxu0 0
    %161 = vmatprep.mubr.bf16.mxu0 0
    %162 = vmatmul.mubr.bf16.gmra.mrb[0].mxu0 %v127
    %v163 = vpop.f32.mrb[0].mxu0
    %v164 = vadd.f32 %v68, %v163
    %v165 = vpop.f32.mrb[0].mxu0
    %v166 = vadd.f32 %v72, %v165
    %v167 = vpop.f32.mrb[0].mxu0
    %v168 = vpop.f32.mrb[0].mxu0
    %169 = vdwg.mxu0
    %170 = vmatprep.subr.bf16.mxu0 %v112
    %171 = vmatpush1.bf16.msra.mxu0 %v111
    %172 = vmatprep.subr.bf16.mxu0 %v116
    %173 = vmatpush1.bf16.msra.mxu0 %v115
    %174 = vmatprep.subr.bf16.mxu0 0
    %175 = vmatpush1.bf16.msra.mxu0 0
    %176 = vmatprep.subr.bf16.mxu0 0
    %177 = vmatpush1.bf16.msra.mxu0 0
    %178 = vmatprep.subr.bf16.mxu0 0
    %179 = vmatpush1.bf16.msra.mxu0 0
    %180 = vmatprep.subr.bf16.mxu0 0
    %181 = vmatpush1.bf16.msra.mxu0 0
    %182 = vmatprep.subr.bf16.mxu0 0
    %183 = vmatpush1.bf16.msra.mxu0 0
    %184 = vmatprep.subr.bf16.mxu0 0
    %185 = vmatpush1.bf16.msra.mxu0 0
    %186 = vmatprep.subr.bf16.mxu0 0
    %187 = vmatpush1.bf16.msra.mxu0 0
    %188 = vmatprep.subr.bf16.mxu0 0
    %189 = vmatpush1.bf16.msra.mxu0 0
    %190 = vmatprep.subr.bf16.mxu0 0
    %191 = vmatpush1.bf16.msra.mxu0 0
    %192 = vmatprep.subr.bf16.mxu0 0
    %193 = vmatpush1.bf16.msra.mxu0 0
    %194 = vmatprep.subr.bf16.mxu0 0
    %195 = vmatpush1.bf16.msra.mxu0 0
    %196 = vmatprep.subr.bf16.mxu0 0
    %197 = vmatpush1.bf16.msra.mxu0 0
    %198 = vmatprep.subr.bf16.mxu0 0
    %199 = vmatpush1.bf16.msra.mxu0 0
    %200 = vmatprep.subr.bf16.mxu0 0
    %201 = vmatpush1.bf16.msra.mxu0 0
    %202 = vmatprep.mubr.bf16.mxu0 0
    %203 = vmatmul.mubr.bf16.gmra.mrb[0].mxu0 %v127
    %v204 = vpop.f32.mrb[0].mxu0
    %v205 = vadd.f32 %v76, %v204
    %v206 = vpop.f32.mrb[0].mxu0
    %v207 = vadd.f32 %v80, %v206
    %v208 = vpop.f32.mrb[0].mxu0
    %v209 = vpop.f32.mrb[0].mxu0
    %210 = vdwg.mxu0
    %v211 = vmax.f32 %v164, 0.0
    %v212 = vmax.f32 %v166, 0.0
    %v213 = vmax.f32 %v205, 0.0
    %v214 = vmax.f32 %v207, 0.0
    %v215 = vpack.c.bf16 %v211, %v211
    %v216 = vpack.c.bf16 %v212, %v212
    %v217 = vpack.c.bf16 %v213, %v213
    %v218 = vpack.c.bf16 %v214, %v214
    %v219 = vld [vmem:[#allocation4] sm:$0xf]
    %v220 = vld [vmem:[#allocation4 + $0x4] sm:$0xf]
    %v221 = vld [vmem:[#allocation4 + $0x8] sm:$0xf]
    %v222 = vld [vmem:[#allocation4 + $0xc] sm:$0xf]
    %v223 = vld [vmem:[#allocation4 + $0x10] sm:$0xf]
    %v224 = vld [vmem:[#allocation4 + $0x14] sm:$0xf]
    %v225 = vld [vmem:[#allocation4 + $0x18] sm:$0xf]
    %v226 = vld [vmem:[#allocation4 + $0x1c] sm:$0xf]
    %v227 = vld [vmem:[#allocation4 + $0x20] sm:$0xf]
    %v228 = vld [vmem:[#allocation4 + $0x24] sm:$0xf]
    %v229 = vld [vmem:[#allocation4 + $0x28] sm:$0xf]
    %v230 = vld [vmem:[#allocation4 + $0x2c] sm:$0xf]
    %v231 = vld [vmem:[#allocation4 + $0x30] sm:$0xf]
    %v232 = vld [vmem:[#allocation4 + $0x34] sm:$0xf]
    %v233 = vld [vmem:[#allocation4 + $0x38] sm:$0xf]
    %v234 = vld [vmem:[#allocation4 + $0x3c] sm:$0xf]
    %v235 = vld [vmem:[#allocation4 + $0x40] sm:$0xf]
    %v236 = vld [vmem:[#allocation4 + $0x44] sm:$0xf]
    %v237 = vld [vmem:[#allocation4 + $0x48] sm:$0xf]
    %v238 = vld [vmem:[#allocation4 + $0x4c] sm:$0xf]
    %v239 = vld [vmem:[#allocation4 + $0x50] sm:$0xf]
    %v240 = vld [vmem:[#allocation4 + $0x54] sm:$0xf]
    %v241 = vld [vmem:[#allocation4 + $0x58] sm:$0xf]
    %v242 = vld [vmem:[#allocation4 + $0x5c] sm:$0xf]
    %v243 = vld [vmem:[#allocation4 + $0x60] sm:$0xf]
    %v244 = vld [vmem:[#allocation4 + $0x64] sm:$0xf]
    %v245 = vld [vmem:[#allocation4 + $0x68] sm:$0xf]
    %v246 = vld [vmem:[#allocation4 + $0x6c] sm:$0xf]
    %v247 = vld [vmem:[#allocation4 + $0x70] sm:$0xf]
    %v248 = vld [vmem:[#allocation4 + $0x74] sm:$0xf]
    %v249 = vld [vmem:[#allocation4 + $0x78] sm:$0xf]
    %v250 = vld [vmem:[#allocation4 + $0x7c] sm:$0xf]
    %v251 = vld [vmem:[#allocation4 + $0x80] sm:$0xf]
    %v252 = vld [vmem:[#allocation4 + $0x84] sm:$0xf]
    %v253 = vld [vmem:[#allocation4 + $0x88] sm:$0xf]
    %v254 = vld [vmem:[#allocation4 + $0x8c] sm:$0xf]
    %v255 = vld [vmem:[#allocation4 + $0x90] sm:$0xf]
    %v256 = vld [vmem:[#allocation4 + $0x94] sm:$0xf]
    %v257 = vld [vmem:[#allocation4 + $0x98] sm:$0xf]
    %v258 = vld [vmem:[#allocation4 + $0x9c] sm:$0xf]
    %v259 = vld [vmem:[#allocation4 + $0xa0] sm:$0xf]
    %v260 = vld [vmem:[#allocation4 + $0xa4] sm:$0xf]
    %v261 = vld [vmem:[#allocation4 + $0xa8] sm:$0xf]
    %v262 = vld [vmem:[#allocation4 + $0xac] sm:$0xf]
    %v263 = vld [vmem:[#allocation4 + $0xb0] sm:$0xf]
    %v264 = vld [vmem:[#allocation4 + $0xb4] sm:$0xf]
    %v265 = vld [vmem:[#allocation4 + $0xb8] sm:$0xf]
    %v266 = vld [vmem:[#allocation4 + $0xbc] sm:$0xf]
    %v267 = vld [vmem:[#allocation4 + $0xc0] sm:$0xf]
    %v268 = vld [vmem:[#allocation4 + $0xc4] sm:$0xf]
    %v269 = vld [vmem:[#allocation4 + $0xc8] sm:$0xf]
    %v270 = vld [vmem:[#allocation4 + $0xcc] sm:$0xf]
    %v271 = vld [vmem:[#allocation4 + $0xd0] sm:$0xf]
    %v272 = vld [vmem:[#allocation4 + $0xd4] sm:$0xf]
    %v273 = vld [vmem:[#allocation4 + $0xd8] sm:$0xf]
    %v274 = vld [vmem:[#allocation4 + $0xdc] sm:$0xf]
    %v275 = vld [vmem:[#allocation4 + $0xe0] sm:$0xf]
    %v276 = vld [vmem:[#allocation4 + $0xe4] sm:$0xf]
    %v277 = vld [vmem:[#allocation4 + $0xe8] sm:$0xf]
    %v278 = vld [vmem:[#allocation4 + $0xec] sm:$0xf]
    %v279 = vld [vmem:[#allocation4 + $0xf0] sm:$0xf]
    %v280 = vld [vmem:[#allocation4 + $0xf4] sm:$0xf]
    %v281 = vld [vmem:[#allocation4 + $0xf8] sm:$0xf]
    %v282 = vld [vmem:[#allocation4 + $0xfc] sm:$0xf]
    %v283 = vld [vmem:[%s4] sm:$0x1]
    %v285 = vlaneseq
    %v286 = vshrl.u32 %v285, 7
    %v287 = vsub.s32 0, %v286
    %v288 = vrot.slane %v283, %v287
    %v354 = vunpack.c.l.b16 %v219
    %v355 = vunpack.c.l.b16 %v220
    %v356 = vunpack.c.l.b16 %v221
    %v357 = vunpack.c.l.b16 %v222
    %v358 = vunpack.c.l.b16 %v223
    %v359 = vunpack.c.l.b16 %v224
    %v360 = vunpack.c.l.b16 %v225
    %v361 = vunpack.c.l.b16 %v226
    %v362 = vunpack.c.l.b16 %v227
    %v363 = vunpack.c.l.b16 %v228
    %v364 = vunpack.c.l.b16 %v229
    %v365 = vunpack.c.l.b16 %v230
    %v366 = vunpack.c.l.b16 %v231
    %v367 = vunpack.c.l.b16 %v232
    %v368 = vunpack.c.l.b16 %v233
    %v369 = vunpack.c.l.b16 %v234
    %v370 = vunpack.c.l.b16 %v235
    %v371 = vunpack.c.l.b16 %v236
    %v372 = vunpack.c.l.b16 %v237
    %v373 = vunpack.c.l.b16 %v238
    %v374 = vunpack.c.l.b16 %v239
    %v375 = vunpack.c.l.b16 %v240
    %v376 = vunpack.c.l.b16 %v241
    %v377 = vunpack.c.l.b16 %v242
    %v378 = vunpack.c.l.b16 %v243
    %v379 = vunpack.c.l.b16 %v244
    %v380 = vunpack.c.l.b16 %v245
    %v381 = vunpack.c.l.b16 %v246
    %v382 = vunpack.c.l.b16 %v247
    %v383 = vunpack.c.l.b16 %v248
    %v384 = vunpack.c.l.b16 %v249
    %v385 = vunpack.c.l.b16 %v250
    %v386 = vunpack.c.l.b16 %v251
    %v387 = vunpack.c.l.b16 %v252
    %v388 = vunpack.c.l.b16 %v253
    %v389 = vunpack.c.l.b16 %v254
    %v390 = vunpack.c.l.b16 %v255
    %v391 = vunpack.c.l.b16 %v256
    %v392 = vunpack.c.l.b16 %v257
    %v393 = vunpack.c.l.b16 %v258
    %v394 = vunpack.c.l.b16 %v259
    %v395 = vunpack.c.l.b16 %v260
    %v396 = vunpack.c.l.b16 %v261
    %v397 = vunpack.c.l.b16 %v262
    %v398 = vunpack.c.l.b16 %v263
    %v399 = vunpack.c.l.b16 %v264
    %v400 = vunpack.c.l.b16 %v265
    %v401 = vunpack.c.l.b16 %v266
    %v402 = vunpack.c.l.b16 %v267
    %v403 = vunpack.c.l.b16 %v268
    %v404 = vunpack.c.l.b16 %v269
    %v405 = vunpack.c.l.b16 %v270
    %v406 = vunpack.c.l.b16 %v271
    %v407 = vunpack.c.l.b16 %v272
    %v408 = vunpack.c.l.b16 %v273
    %v409 = vunpack.c.l.b16 %v274
    %v410 = vunpack.c.l.b16 %v275
    %v411 = vunpack.c.l.b16 %v276
    %v412 = vunpack.c.l.b16 %v277
    %v413 = vunpack.c.l.b16 %v278
    %v414 = vunpack.c.l.b16 %v279
    %v415 = vunpack.c.l.b16 %v280
    %v416 = vunpack.c.l.b16 %v281
    %v417 = vunpack.c.l.b16 %v282
    %v418 = vpack.c.b16 %v355, %v354
    %v419 = vpack.c.b16 %v357, %v356
    %v420 = vpack.c.b16 %v359, %v358
    %v421 = vpack.c.b16 %v361, %v360
    %v422 = vpack.c.b16 %v363, %v362
    %v423 = vpack.c.b16 %v365, %v364
    %v424 = vpack.c.b16 %v367, %v366
    %v425 = vpack.c.b16 %v369, %v368
    %v426 = vpack.c.b16 %v371, %v370
    %v427 = vpack.c.b16 %v373, %v372
    %v428 = vpack.c.b16 %v375, %v374
    %v429 = vpack.c.b16 %v377, %v376
    %v430 = vpack.c.b16 %v379, %v378
    %v431 = vpack.c.b16 %v381, %v380
    %v432 = vpack.c.b16 %v383, %v382
    %v433 = vpack.c.b16 %v385, %v384
    %v434 = vpack.c.b16 %v387, %v386
    %v435 = vpack.c.b16 %v389, %v388
    %v436 = vpack.c.b16 %v391, %v390
    %v437 = vpack.c.b16 %v393, %v392
    %v438 = vpack.c.b16 %v395, %v394
    %v439 = vpack.c.b16 %v397, %v396
    %v440 = vpack.c.b16 %v399, %v398
    %v441 = vpack.c.b16 %v401, %v400
    %v442 = vpack.c.b16 %v403, %v402
    %v443 = vpack.c.b16 %v405, %v404
    %v444 = vpack.c.b16 %v407, %v406
    %v445 = vpack.c.b16 %v409, %v408
    %v446 = vpack.c.b16 %v411, %v410
    %v447 = vpack.c.b16 %v413, %v412
    %v448 = vpack.c.b16 %v415, %v414
    %v449 = vpack.c.b16 %v417, %v416
    %482 = vmatprep.subr.bf16.mxu0 0
    %483 = vmatpush1.bf16.msra.mxu0 %v418
    %484 = vmatprep.subr.bf16.mxu0 0
    %485 = vmatpush1.bf16.msra.mxu0 %v419
    %486 = vmatprep.subr.bf16.mxu0 0
    %487 = vmatpush1.bf16.msra.mxu0 %v420
    %488 = vmatprep.subr.bf16.mxu0 0
    %489 = vmatpush1.bf16.msra.mxu0 %v421
    %490 = vmatprep.subr.bf16.mxu0 0
    %491 = vmatpush1.bf16.msra.mxu0 %v422
    %492 = vmatprep.subr.bf16.mxu0 0
    %493 = vmatpush1.bf16.msra.mxu0 %v423
    %494 = vmatprep.subr.bf16.mxu0 0
    %495 = vmatpush1.bf16.msra.mxu0 %v424
    %496 = vmatprep.subr.bf16.mxu0 0
    %497 = vmatpush1.bf16.msra.mxu0 %v425
    %498 = vmatprep.subr.bf16.mxu0 0
    %499 = vmatpush1.bf16.msra.mxu0 %v426
    %500 = vmatprep.subr.bf16.mxu0 0
    %501 = vmatpush1.bf16.msra.mxu0 %v427
    %502 = vmatprep.subr.bf16.mxu0 0
    %503 = vmatpush1.bf16.msra.mxu0 %v428
    %504 = vmatprep.subr.bf16.mxu0 0
    %505 = vmatpush1.bf16.msra.mxu0 %v429
    %506 = vmatprep.subr.bf16.mxu0 0
    %507 = vmatpush1.bf16.msra.mxu0 %v430
    %508 = vmatprep.subr.bf16.mxu0 0
    %509 = vmatpush1.bf16.msra.mxu0 %v431
    %510 = vmatprep.subr.bf16.mxu0 0
    %511 = vmatpush1.bf16.msra.mxu0 %v432
    %512 = vmatprep.subr.bf16.mxu0 0
    %513 = vmatpush1.bf16.msra.mxu0 %v433
    %514 = vmatprep.mubr.bf16.mxu0 %v216
    %515 = vmatmul.mubr.bf16.gmra.mrb[0].mxu0 %v215
    %v516 = vpop.f32.mrb[0].mxu0
    %v517 = vadd.f32 %v288, %v516
    %v518 = vpop.f32.mrb[0].mxu0
    %v519 = vpop.f32.mrb[0].mxu0
    %v520 = vpop.f32.mrb[0].mxu0
    %521 = vdwg.mxu0
    %522 = vmatprep.subr.bf16.mxu0 0
    %523 = vmatpush1.bf16.msra.mxu0 %v434
    %524 = vmatprep.subr.bf16.mxu0 0
    %525 = vmatpush1.bf16.msra.mxu0 %v435
    %526 = vmatprep.subr.bf16.mxu0 0
    %527 = vmatpush1.bf16.msra.mxu0 %v436
    %528 = vmatprep.subr.bf16.mxu0 0
    %529 = vmatpush1.bf16.msra.mxu0 %v437
    %530 = vmatprep.subr.bf16.mxu0 0
    %531 = vmatpush1.bf16.msra.mxu0 %v438
    %532 = vmatprep.subr.bf16.mxu0 0
    %533 = vmatpush1.bf16.msra.mxu0 %v439
    %534 = vmatprep.subr.bf16.mxu0 0
    %535 = vmatpush1.bf16.msra.mxu0 %v440
    %536 = vmatprep.subr.bf16.mxu0 0
    %537 = vmatpush1.bf16.msra.mxu0 %v441
    %538 = vmatprep.subr.bf16.mxu0 0
    %539 = vmatpush1.bf16.msra.mxu0 %v442
    %540 = vmatprep.subr.bf16.mxu0 0
    %541 = vmatpush1.bf16.msra.mxu0 %v443
    %542 = vmatprep.subr.bf16.mxu0 0
    %543 = vmatpush1.bf16.msra.mxu0 %v444
    %544 = vmatprep.subr.bf16.mxu0 0
    %545 = vmatpush1.bf16.msra.mxu0 %v445
    %546 = vmatprep.subr.bf16.mxu0 0
    %547 = vmatpush1.bf16.msra.mxu0 %v446
    %548 = vmatprep.subr.bf16.mxu0 0
    %549 = vmatpush1.bf16.msra.mxu0 %v447
    %550 = vmatprep.subr.bf16.mxu0 0
    %551 = vmatpush1.bf16.msra.mxu0 %v448
    %552 = vmatprep.subr.bf16.mxu0 0
    %553 = vmatpush1.bf16.msra.mxu0 %v449
    %554 = vmatprep.mubr.bf16.mxu0 %v218
    %555 = vmatmul.mubr.bf16.gmra.mrb[0].mxu0 %v217
    %v556 = vpop.f32.mrb[0].mxu0
    %v557 = vadd.f32 %v517, %v556
    %v558 = vpop.f32.mrb[0].mxu0
    %v559 = vpop.f32.mrb[0].mxu0
    %v560 = vpop.f32.mrb[0].mxu0
    %561 = vdwg.mxu0
    %v562 = vmax.f32 %v557, 0.0
    %v563 = vpack.c.bf16 %v562, %v562
    %v564 = vld [vmem:[%s5] sm:$0xf]
    %v565 = vld [vmem:[%s5 + $0x4] sm:$0xf]
    %v566 = vld [vmem:[%s5 + $0x8] sm:$0xf]
    %v567 = vld [vmem:[%s5 + $0xc] sm:$0xf]
    %v568 = vld [vmem:[%s5 + $0x10] sm:$0xf]
    %v569 = vld [vmem:[%s5 + $0x14] sm:$0xf]
    %v570 = vld [vmem:[%s5 + $0x18] sm:$0xf]
    %v571 = vld [vmem:[%s5 + $0x1c] sm:$0xf]
    %v572 = vld [vmem:[%s5 + $0x20] sm:$0xf]
    %v573 = vld [vmem:[%s5 + $0x24] sm:$0xf]
    %v574 = vld [vmem:[%s5 + $0x28] sm:$0xf]
    %v575 = vld [vmem:[%s5 + $0x2c] sm:$0xf]
    %v576 = vld [vmem:[%s5 + $0x30] sm:$0xf]
    %v577 = vld [vmem:[%s5 + $0x34] sm:$0xf]
    %v578 = vld [vmem:[%s5 + $0x38] sm:$0xf]
    %v579 = vld [vmem:[%s5 + $0x3c] sm:$0xf]
    %v580 = vld [vmem:[%s6] sm:$0x1]
    %v582 = vlaneseq
    %v583 = vshrl.u32 %v582, 7
    %v584 = vsub.s32 0, %v583
    %v585 = vrot.slane %v580, %v584
    %v603 = vunpack.c.l.b16 %v564
    %v604 = vunpack.c.l.b16 %v565
    %v605 = vunpack.c.l.b16 %v566
    %v606 = vunpack.c.l.b16 %v567
    %v607 = vunpack.c.l.b16 %v568
    %v608 = vunpack.c.l.b16 %v569
    %v609 = vunpack.c.l.b16 %v570
    %v610 = vunpack.c.l.b16 %v571
    %v611 = vunpack.c.l.b16 %v572
    %v612 = vunpack.c.l.b16 %v573
    %v613 = vunpack.c.l.b16 %v574
    %v614 = vunpack.c.l.b16 %v575
    %v615 = vunpack.c.l.b16 %v576
    %v616 = vunpack.c.l.b16 %v577
    %v617 = vunpack.c.l.b16 %v578
    %v618 = vunpack.c.l.b16 %v579
    %v619 = vpack.c.b16 %v604, %v603
    %v620 = vpack.c.b16 %v606, %v605
    %v621 = vpack.c.b16 %v608, %v607
    %v622 = vpack.c.b16 %v610, %v609
    %v623 = vpack.c.b16 %v612, %v611
    %v624 = vpack.c.b16 %v614, %v613
    %v625 = vpack.c.b16 %v616, %v615
    %v626 = vpack.c.b16 %v618, %v617
    %635 = vmatprep.subr.bf16.mxu0 0
    %636 = vmatpush1.bf16.msra.mxu0 %v619
    %637 = vmatprep.subr.bf16.mxu0 0
    %638 = vmatpush1.bf16.msra.mxu0 %v620
    %639 = vmatprep.subr.bf16.mxu0 0
    %640 = vmatpush1.bf16.msra.mxu0 %v621
    %641 = vmatprep.subr.bf16.mxu0 0
    %642 = vmatpush1.bf16.msra.mxu0 %v622
    %643 = vmatprep.subr.bf16.mxu0 0
    %644 = vmatpush1.bf16.msra.mxu0 %v623
    %645 = vmatprep.subr.bf16.mxu0 0
    %646 = vmatpush1.bf16.msra.mxu0 %v624
    %647 = vmatprep.subr.bf16.mxu0 0
    %648 = vmatpush1.bf16.msra.mxu0 %v625
    %649 = vmatprep.subr.bf16.mxu0 0
    %650 = vmatpush1.bf16.msra.mxu0 %v626
    %651 = vmatprep.subr.bf16.mxu0 0
    %652 = vmatpush1.bf16.msra.mxu0 0
    %653 = vmatprep.subr.bf16.mxu0 0
    %654 = vmatpush1.bf16.msra.mxu0 0
    %655 = vmatprep.subr.bf16.mxu0 0
    %656 = vmatpush1.bf16.msra.mxu0 0
    %657 = vmatprep.subr.bf16.mxu0 0
    %658 = vmatpush1.bf16.msra.mxu0 0
    %659 = vmatprep.subr.bf16.mxu0 0
    %660 = vmatpush1.bf16.msra.mxu0 0
    %661 = vmatprep.subr.bf16.mxu0 0
    %662 = vmatpush1.bf16.msra.mxu0 0
    %663 = vmatprep.subr.bf16.mxu0 0
    %664 = vmatpush1.bf16.msra.mxu0 0
    %665 = vmatprep.subr.bf16.mxu0 0
    %666 = vmatpush1.bf16.msra.mxu0 0
    %667 = vmatprep.mubr.bf16.mxu0 0
    %668 = vmatmul.mubr.bf16.gmra.mrb[0].mxu0 %v563
    %v669 = vpop.f32.mrb[0].mxu0
    %v670 = vadd.f32 %v585, %v669
    %v671 = vpop.f32.mrb[0].mxu0
    %v672 = vpop.f32.mrb[0].mxu0
    %v673 = vpop.f32.mrb[0].mxu0
    %674 = vdwg.mxu0
    %vm675 = vcmask 31744
    %676 = vst.msk [vmem:[%s7] sm:$0xff] %vm675, %v670
    // Predicated region
    $region38: #{tpu_custom_call.1} parent=1 // pred_check
      _
    $region39: #{tpu_custom_call.1} parent=1 // pred_check_branch
      %678 = sbr.rel (0) target = $region41
    $region40: #{tpu_custom_call.1} parent=1 // pred_region
      _
    $region41: #{tpu_custom_call.1} parent=1 // pred_fallthru
      _
    // Predicated region
    $region42: #{tpu_custom_call.1} parent=1 // pred_check
      _
    $region43: #{tpu_custom_call.1} parent=1 // pred_check_branch
      %680 = sbr.rel (0) target = $region45
    $region44: #{tpu_custom_call.1} parent=1 // pred_region
      _
    $region45: #{tpu_custom_call.1} parent=1 // pred_fallthru
      _
    %681 = vsyncpa [#allocation3], 1
    %682 = vsyncpa [#allocation5], 1

</llo_original>
